<compile_context>
chip_gen: v6e
topology: v6e:2x2x1
jax: 0.10.0
libtpu: 0.0.40
codegen_flags: <defaults>
</compile_context>

<pallas_src>
import jax
import jax.numpy as jnp
from jax import lax
from jax.experimental import pallas as pl
from jax.experimental.pallas import tpu as pltpu


_LEAKY_SLOPE = 0.01          # nn.LeakyReLU default negative_slope
_SUBLANE = 8                 # f32 sublane granularity for batch tiles
_MEGACORE_MIN_BATCH = 1024   # only force >=2 grid blocks above this batch


def _leaky_relu(x):
    return jnp.where(x > 0, x, _LEAKY_SLOPE * x)


def _round_up(n, m):
    return ((n + m - 1) // m) * m


def _mlp_kernel(x_ref,
                w1_ref, b1_ref,
                w2_ref, b2_ref,
                w3_ref, b3_ref,
                w4_ref, b4_ref,
                o_ref):
    # fc1 + LeakyReLU   (dropout1 = identity at inference)
    h = jnp.dot(x_ref[...], w1_ref[...], preferred_element_type=jnp.float32)
    h = _leaky_relu(h + b1_ref[...])
    # fc2 + LeakyReLU   (dropout2 = identity at inference)
    h = jnp.dot(h.astype(w2_ref.dtype), w2_ref[...],
                preferred_element_type=jnp.float32)
    h = _leaky_relu(h + b2_ref[...])
    # fc3 + LeakyReLU   (dropout3 = identity at inference)
    h = jnp.dot(h.astype(w3_ref.dtype), w3_ref[...],
                preferred_element_type=jnp.float32)
    h = _leaky_relu(h + b3_ref[...])
    # fc4 (no activation), computed at the real output width (no padding).
    out = jnp.dot(h.astype(w4_ref.dtype), w4_ref[...],
                  preferred_element_type=jnp.float32) + b4_ref[...]
    o_ref[...] = out.astype(o_ref.dtype)


def neural_net_forward(x, params, *, block_batch=4096,
                       compute_dtype=jnp.bfloat16):
    """Fused 4-layer MLP forward pass in a single Pallas kernel.

    x: (batch, input_size) float32
    params: dict with w1..w4 of shape (in, out) and b1..b4 of shape (1, out),
            all float32 (weights pre-transposed so y = x @ W + b).
    compute_dtype: dtype used for the MXU inputs (x and the weights).
            bfloat16 (default) halves activation HBM traffic; float32 matches
            the PyTorch model exactly.  Accumulation is always f32.
    """
    batch, input_size = x.shape
    hidden_size = params["w1"].shape[1]
    output_size = params["w4"].shape[1]

    # --- dtype plan: compute_dtype for x + weights (MXU inputs), f32 rest ---
    cdt = jnp.dtype(compute_dtype)
    xb = x.astype(cdt)
    w1 = params["w1"].astype(cdt)
    w2 = params["w2"].astype(cdt)
    w3 = params["w3"].astype(cdt)
    w4 = params["w4"].astype(cdt)
    b1 = params["b1"].astype(jnp.float32)
    b2 = params["b2"].astype(jnp.float32)
    b3 = params["b3"].astype(jnp.float32)
    b4 = params["b4"].astype(jnp.float32)

    # --- batch tiling: tall-M tiles, padded to a whole number of tiles ------
    tb = min(block_batch, _round_up(batch, _SUBLANE))
    tb = _round_up(tb, _SUBLANE)
    # v7x megacore: when the batch is big enough, never collapse the whole
    # batch into one grid step -- keep >=2 blocks so both TensorCores work.
    if batch >= _MEGACORE_MIN_BATCH and pl.cdiv(batch, tb) < 2:
        tb = _round_up(pl.cdiv(batch, 2), _SUBLANE)
    num_blocks = pl.cdiv(batch, tb)
    padded_batch = num_blocks * tb
    if padded_batch != batch:
        xb = jnp.pad(xb, ((0, padded_batch - batch), (0, 0)))

    # x / out tiles move with the grid; weights & biases pinned to block (0,0)
    # (pinned blocks keep the same block index, so they are not re-fetched).
    x_spec = pl.BlockSpec((tb, input_size), lambda i: (i, 0))
    o_spec = pl.BlockSpec((tb, output_size), lambda i: (i, 0))
    pinned = lambda a: pl.BlockSpec(a.shape, lambda i: (0, 0))

    weight_args = (w1, b1, w2, b2, w3, b3, w4, b4)

    flops = 2 * padded_batch * (input_size * hidden_size
                                + 2 * hidden_size * hidden_size
                                + hidden_size * output_size)
    bytes_accessed = (int(xb.size) * xb.dtype.itemsize          # activations in
                      + padded_batch * output_size * 4           # dense f32 out
                      + sum(int(a.size) * a.dtype.itemsize for a in weight_args))

    out = pl.pallas_call(
        _mlp_kernel,
        out_shape=jax.ShapeDtypeStruct((padded_batch, output_size), jnp.float32),
        grid=(num_blocks,),
        in_specs=[x_spec] + [pinned(a) for a in weight_args],
        out_specs=o_spec,
        compiler_params=pltpu.CompilerParams(
            dimension_semantics=("parallel",)),
        cost_estimate=pl.CostEstimate(
            flops=int(flops),
            transcendentals=0,
            bytes_accessed=int(bytes_accessed)),
    )(xb, *weight_args)

    # strip batch padding (output columns are already exactly output_size)
    return out[:batch, :]


def init_params(key, input_size, hidden_size, output_size):
    """Deterministic init mimicking nn.Linear default (U[-1/sqrt(fan_in), +])."""
    def linear(key, fan_in, fan_out):
        kw, kb = jax.random.split(key)
        bound = 1.0 / jnp.sqrt(jnp.float32(fan_in))
        # store weight already transposed: (in, out)
        w = jax.random.uniform(kw, (fan_in, fan_out), jnp.float32, -bound, bound)
        b = jax.random.uniform(kb, (1, fan_out), jnp.float32, -bound, bound)
        return w, b

    k1, k2, k3, k4 = jax.random.split(key, 4)
    w1, b1 = linear(k1, input_size, hidden_size)
    w2, b2 = linear(k2, hidden_size, hidden_size)
    w3, b3 = linear(k3, hidden_size, hidden_size)
    w4, b4 = linear(k4, hidden_size, output_size)
    return dict(w1=w1, b1=b1, w2=w2, b2=b2, w3=w3, b3=b3, w4=w4, b4=b4)


def _reference_forward(x, p, compute_dtype=jnp.bfloat16):
    """Reference with the same MXU-input-dtype / f32-accumulate precision plan."""
    cdt = jnp.dtype(compute_dtype)
    hi = jax.lax.Precision.HIGHEST

    def dense(a, w, b):
        return jnp.dot(a.astype(cdt), w.astype(cdt),
                       preferred_element_type=jnp.float32, precision=hi) + b

    h = dense(x, p["w1"], p["b1"])
    h = jnp.where(h > 0, h, _LEAKY_SLOPE * h)
    h = dense(h, p["w2"], p["b2"])
    h = jnp.where(h > 0, h, _LEAKY_SLOPE * h)
    h = dense(h, p["w3"], p["b3"])
    h = jnp.where(h > 0, h, _LEAKY_SLOPE * h)
    return dense(h, p["w4"], p["b4"])


if __name__ == "__main__":
    # Small shapes consistent with the module's parameters dict.
    input_size, hidden_size, output_size = 8, 32, 1
    batch = 10   # deliberately not a multiple of 8, to exercise batch padding

    key = jax.random.PRNGKey(0)
    kx, kp = jax.random.split(key)
    x = jax.random.normal(kx, (batch, input_size), dtype=jnp.float32)
    params = init_params(kp, input_size, hidden_size, output_size)

    # Default (bf16 MXU inputs, f32 accumulation) path.
    out = neural_net_forward(x, params)
    out = jax.block_until_ready(out)
    ref = _reference_forward(x, params, jnp.bfloat16)
    assert out.shape == (batch, output_size)
    assert jnp.allclose(out, ref, atol=1e-5, rtol=1e-5), (
        f"bf16 path: max abs err {jnp.max(jnp.abs(out - ref))}")

    # Full-f32 path (matches the PyTorch model's precision).
    out32 = neural_net_forward(x, params, compute_dtype=jnp.float32)
    out32 = jax.block_until_ready(out32)
    ref32 = _reference_forward(x, params, jnp.float32)
    assert out32.shape == (batch, output_size)
    assert jnp.allclose(out32, ref32, atol=5e-3, rtol=5e-3), (
        f"f32 path: max abs err {jnp.max(jnp.abs(out32 - ref32))}")

    print("KERNEL_OK")
</pallas_src>

<mosaic_0001>
module attributes {stable_mosaic.version = 11 : i64} {
  func.func @_mlp_kernel(%arg0: i32, %arg1: memref<16x8xbf16, #tpu.memory_space<vmem>>, %arg2: memref<8x32xbf16, #tpu.memory_space<vmem>>, %arg3: memref<1x32xf32, #tpu.memory_space<vmem>>, %arg4: memref<32x32xbf16, #tpu.memory_space<vmem>>, %arg5: memref<1x32xf32, #tpu.memory_space<vmem>>, %arg6: memref<32x32xbf16, #tpu.memory_space<vmem>>, %arg7: memref<1x32xf32, #tpu.memory_space<vmem>>, %arg8: memref<32x1xbf16, #tpu.memory_space<vmem>>, %arg9: memref<1x1xf32, #tpu.memory_space<vmem>>, %arg10: memref<16x1xf32, #tpu.memory_space<vmem>>) attributes {dimension_semantics = [#tpu.dimension_semantics<parallel>], iteration_bounds = array<i64: 1>, scalar_prefetch = 0 : i64, scratch_operands = 0 : i64, tpu.core_type = #tpu.core_type<tc>, window_params = [{transform_indices = @transform_0, window_bounds = array<i64: 16, 8>}, {pipeline_mode = #tpu.pipeline_mode<synchronous>, transform_indices = @transform_1, window_bounds = array<i64: 8, 32>}, {pipeline_mode = #tpu.pipeline_mode<synchronous>, transform_indices = @transform_2, window_bounds = array<i64: 1, 32>}, {pipeline_mode = #tpu.pipeline_mode<synchronous>, transform_indices = @transform_3, window_bounds = array<i64: 32, 32>}, {pipeline_mode = #tpu.pipeline_mode<synchronous>, transform_indices = @transform_4, window_bounds = array<i64: 1, 32>}, {pipeline_mode = #tpu.pipeline_mode<synchronous>, transform_indices = @transform_5, window_bounds = array<i64: 32, 32>}, {pipeline_mode = #tpu.pipeline_mode<synchronous>, transform_indices = @transform_6, window_bounds = array<i64: 1, 32>}, {pipeline_mode = #tpu.pipeline_mode<synchronous>, transform_indices = @transform_7, window_bounds = array<i64: 32, 1>}, {pipeline_mode = #tpu.pipeline_mode<synchronous>, transform_indices = @transform_8, window_bounds = array<i64: 1, 1>}, {transform_indices = @transform_9, window_bounds = array<i64: 16, 1>}]} {
    %c0 = arith.constant 0 : index
    %c0_0 = arith.constant 0 : index
    %0 = vector.load %arg1[%c0, %c0_0] : memref<16x8xbf16, #tpu.memory_space<vmem>>, vector<16x8xbf16>
    %c0_1 = arith.constant 0 : index
    %c0_2 = arith.constant 0 : index
    %1 = vector.load %arg2[%c0_1, %c0_2] : memref<8x32xbf16, #tpu.memory_space<vmem>>, vector<8x32xbf16>
    %cst = arith.constant dense<0.000000e+00> : vector<16x32xf32>
    %2 = tpu.matmul %0, %1, %cst {dimension_numbers = #tpu.dot_dimension_numbers<[1], [0], [0], [1], [0, 0, 1, 1], [], []>} : vector<16x8xbf16>, vector<8x32xbf16>, vector<16x32xf32> -> vector<16x32xf32>
    %c0_3 = arith.constant 0 : index
    %c0_4 = arith.constant 0 : index
    %3 = vector.load %arg3[%c0_3, %c0_4] : memref<1x32xf32, #tpu.memory_space<vmem>>, vector<1x32xf32>
    %4 = vector.broadcast %3 : vector<1x32xf32> to vector<16x32xf32>
    %5 = arith.addf %2, %4 : vector<16x32xf32>
    %cst_5 = arith.constant 0.000000e+00 : f32
    %6 = vector.broadcast %cst_5 : f32 to vector<16x32xf32>
    %7 = arith.cmpf ogt, %5, %6 : vector<16x32xf32>
    %cst_6 = arith.constant 0.00999999977 : f32
    %8 = vector.broadcast %cst_6 : f32 to vector<16x32xf32>
    %9 = arith.mulf %8, %5 : vector<16x32xf32>
    %10 = arith.select %7, %5, %9 : vector<16x32xi1>, vector<16x32xf32>
    %11 = arith.truncf %10 : vector<16x32xf32> to vector<16x32xbf16>
    %c0_7 = arith.constant 0 : index
    %c0_8 = arith.constant 0 : index
    %12 = vector.load %arg4[%c0_7, %c0_8] : memref<32x32xbf16, #tpu.memory_space<vmem>>, vector<32x32xbf16>
    %cst_9 = arith.constant dense<0.000000e+00> : vector<16x32xf32>
    %13 = tpu.matmul %11, %12, %cst_9 {dimension_numbers = #tpu.dot_dimension_numbers<[1], [0], [0], [1], [0, 0, 1, 1], [], []>} : vector<16x32xbf16>, vector<32x32xbf16>, vector<16x32xf32> -> vector<16x32xf32>
    %c0_10 = arith.constant 0 : index
    %c0_11 = arith.constant 0 : index
    %14 = vector.load %arg5[%c0_10, %c0_11] : memref<1x32xf32, #tpu.memory_space<vmem>>, vector<1x32xf32>
    %15 = vector.broadcast %14 : vector<1x32xf32> to vector<16x32xf32>
    %16 = arith.addf %13, %15 : vector<16x32xf32>
    %cst_12 = arith.constant 0.000000e+00 : f32
    %17 = vector.broadcast %cst_12 : f32 to vector<16x32xf32>
    %18 = arith.cmpf ogt, %16, %17 : vector<16x32xf32>
    %cst_13 = arith.constant 0.00999999977 : f32
    %19 = vector.broadcast %cst_13 : f32 to vector<16x32xf32>
    %20 = arith.mulf %19, %16 : vector<16x32xf32>
    %21 = arith.select %18, %16, %20 : vector<16x32xi1>, vector<16x32xf32>
    %22 = arith.truncf %21 : vector<16x32xf32> to vector<16x32xbf16>
    %c0_14 = arith.constant 0 : index
    %c0_15 = arith.constant 0 : index
    %23 = vector.load %arg6[%c0_14, %c0_15] : memref<32x32xbf16, #tpu.memory_space<vmem>>, vector<32x32xbf16>
    %cst_16 = arith.constant dense<0.000000e+00> : vector<16x32xf32>
    %24 = tpu.matmul %22, %23, %cst_16 {dimension_numbers = #tpu.dot_dimension_numbers<[1], [0], [0], [1], [0, 0, 1, 1], [], []>} : vector<16x32xbf16>, vector<32x32xbf16>, vector<16x32xf32> -> vector<16x32xf32>
    %c0_17 = arith.constant 0 : index
    %c0_18 = arith.constant 0 : index
    %25 = vector.load %arg7[%c0_17, %c0_18] : memref<1x32xf32, #tpu.memory_space<vmem>>, vector<1x32xf32>
    %26 = vector.broadcast %25 : vector<1x32xf32> to vector<16x32xf32>
    %27 = arith.addf %24, %26 : vector<16x32xf32>
    %cst_19 = arith.constant 0.000000e+00 : f32
    %28 = vector.broadcast %cst_19 : f32 to vector<16x32xf32>
    %29 = arith.cmpf ogt, %27, %28 : vector<16x32xf32>
    %cst_20 = arith.constant 0.00999999977 : f32
    %30 = vector.broadcast %cst_20 : f32 to vector<16x32xf32>
    %31 = arith.mulf %30, %27 : vector<16x32xf32>
    %32 = arith.select %29, %27, %31 : vector<16x32xi1>, vector<16x32xf32>
    %33 = arith.truncf %32 : vector<16x32xf32> to vector<16x32xbf16>
    %c0_21 = arith.constant 0 : index
    %c0_22 = arith.constant 0 : index
    %34 = vector.load %arg8[%c0_21, %c0_22] : memref<32x1xbf16, #tpu.memory_space<vmem>>, vector<32x1xbf16>
    %cst_23 = arith.constant dense<0.000000e+00> : vector<16x1xf32>
    %35 = tpu.matmul %33, %34, %cst_23 {dimension_numbers = #tpu.dot_dimension_numbers<[1], [0], [0], [1], [0, 0, 1, 1], [], []>} : vector<16x32xbf16>, vector<32x1xbf16>, vector<16x1xf32> -> vector<16x1xf32>
    %c0_24 = arith.constant 0 : index
    %c0_25 = arith.constant 0 : index
    %36 = vector.load %arg9[%c0_24, %c0_25] : memref<1x1xf32, #tpu.memory_space<vmem>>, vector<1x1xf32>
    %37 = vector.broadcast %36 : vector<1x1xf32> to vector<16x1xf32>
    %38 = arith.addf %35, %37 : vector<16x1xf32>
    %c0_26 = arith.constant 0 : index
    %c0_27 = arith.constant 0 : index
    %39 = vector.load %arg10[%c0_26, %c0_27] : memref<16x1xf32, #tpu.memory_space<vmem>>, vector<16x1xf32>
    tpu.vector_store %arg10[%c0_26, %c0_27], %38 {strides = array<i32>} : memref<16x1xf32, #tpu.memory_space<vmem>>, vector<16x1xf32>,
    return
  }
  func.func @transform_0(%arg0: i32) -> (i32, i32) {
    %c0_i32 = arith.constant 0 : i32
    %c0_i32_0 = arith.constant 0 : i32
    return %arg0, %c0_i32 : i32, i32
  }
  func.func @transform_1(%arg0: i32) -> (i32, i32) {
    %c0_i32 = arith.constant 0 : i32
    %c0_i32_0 = arith.constant 0 : i32
    %c0_i32_1 = arith.constant 0 : i32
    return %c0_i32, %c0_i32_0 : i32, i32
  }
  func.func @transform_2(%arg0: i32) -> (i32, i32) {
    %c0_i32 = arith.constant 0 : i32
    %c0_i32_0 = arith.constant 0 : i32
    %c0_i32_1 = arith.constant 0 : i32
    return %c0_i32, %c0_i32_0 : i32, i32
  }
  func.func @transform_3(%arg0: i32) -> (i32, i32) {
    %c0_i32 = arith.constant 0 : i32
    %c0_i32_0 = arith.constant 0 : i32
    %c0_i32_1 = arith.constant 0 : i32
    return %c0_i32, %c0_i32_0 : i32, i32
  }
  func.func @transform_4(%arg0: i32) -> (i32, i32) {
    %c0_i32 = arith.constant 0 : i32
    %c0_i32_0 = arith.constant 0 : i32
    %c0_i32_1 = arith.constant 0 : i32
    return %c0_i32, %c0_i32_0 : i32, i32
  }
  func.func @transform_5(%arg0: i32) -> (i32, i32) {
    %c0_i32 = arith.constant 0 : i32
    %c0_i32_0 = arith.constant 0 : i32
    %c0_i32_1 = arith.constant 0 : i32
    return %c0_i32, %c0_i32_0 : i32, i32
  }
  func.func @transform_6(%arg0: i32) -> (i32, i32) {
    %c0_i32 = arith.constant 0 : i32
    %c0_i32_0 = arith.constant 0 : i32
    %c0_i32_1 = arith.constant 0 : i32
    return %c0_i32, %c0_i32_0 : i32, i32
  }
  func.func @transform_7(%arg0: i32) -> (i32, i32) {
    %c0_i32 = arith.constant 0 : i32
    %c0_i32_0 = arith.constant 0 : i32
    %c0_i32_1 = arith.constant 0 : i32
    return %c0_i32, %c0_i32_0 : i32, i32
  }
  func.func @transform_8(%arg0: i32) -> (i32, i32) {
    %c0_i32 = arith.constant 0 : i32
    %c0_i32_0 = arith.constant 0 : i32
    %c0_i32_1 = arith.constant 0 : i32
    return %c0_i32, %c0_i32_0 : i32, i32
  }
  func.func @transform_9(%arg0: i32) -> (i32, i32) {
    %c0_i32 = arith.constant 0 : i32
    %c0_i32_0 = arith.constant 0 : i32
    return %arg0, %c0_i32 : i32, i32
  }
}

</mosaic_0001>

<llo_original>
// kernel: tpu_custom_call.1
$region0: #{tpu_custom_call.1}
  #allocation0 [shape = 'u32[]', space=smem, size = 0x4, offset = 0x4, fixed_abs, tag = 'smem constant byte address 0x4 - core index']
  #allocation1 [shape = 'u32[144,128]{1,0:T(1,128)}', space=vmem, size = 0x12000, scoped, tag = 'internal scratch']
  #allocation2 [shape = 'f32[1,1]{1,0:T(1,128)S(1)}', space=vmem, size = 0x200, scoped, tag = 'scoped memory for tpu_custom_call.1']
  %s0 = inlined_call_operand.vmem [shape: bf16[16,8], index: 0, kind: input, shape index: {}]
  %s1 = inlined_call_operand.hbm [shape: bf16[8,32], index: 1, kind: input, shape index: {}]
  %s2 = inlined_call_operand.vmem [shape: f32[1,32], index: 2, kind: input, shape index: {}]
  %s3 = inlined_call_operand.vmem [shape: bf16[32,32], index: 3, kind: input, shape index: {}]
  %s4 = inlined_call_operand.vmem [shape: f32[1,32], index: 4, kind: input, shape index: {}]
  %s5 = inlined_call_operand.vmem [shape: bf16[32,32], index: 5, kind: input, shape index: {}]
  %s6 = inlined_call_operand.vmem [shape: f32[1,32], index: 6, kind: input, shape index: {}]
  %s7 = inlined_call_operand.vmem [shape: bf16[32,1], index: 7, kind: input, shape index: {}]
  %s8 = inlined_call_operand.<no memory space> [shape: f32[1,1], index: 8, kind: input, shape index: {}]
  %s9 = inlined_call_operand.vmem [shape: f32[16,1], index: 9, kind: output, shape index: {}]
  %s10 = sld [smem:[#allocation0]]
  $region50: #{tpu_custom_call.1} parent=0
    _
  %s12 = ssub.s32 1, %s10
  %s13 = scalar_select 0, %s12, %s10
  %v14 = vstv %s8
  %15 = vst [vmem:[#allocation2] sm:$0x1] %v14
  $region1: #{tpu_custom_call.1} parent=0
    #allocation3 [shape = 'u8[2048]{0}', space=vmem, size = 0x800, scoped, tag = 'input window, operand 1, single buffered']
    #allocation4 [shape = 's32[1]{0}', space=sflag, size = 0x4, scoped, tag = 'scoped memory for tpu_custom_call.1']
    %16 = vsyncpa [#allocation4], 0
    // Predicated region
    $region2: #{tpu_custom_call.1} parent=1 // pred_check
      _
    $region3: #{tpu_custom_call.1} parent=1 // pred_check_branch
      %18 = sbr.rel (0) target = $region5
    $region4: #{tpu_custom_call.1} parent=1 // pred_region
      _
    $region5: #{tpu_custom_call.1} parent=1 // pred_fallthru
      _
    // Predicated region
    $region6: #{tpu_custom_call.1} parent=1 // pred_check
      _
    $region7: #{tpu_custom_call.1} parent=1 // pred_check_branch
      %20 = sbr.rel (0) target = $region9
    $region8: #{tpu_custom_call.1} parent=1 // pred_region
      %s22 = ssub.s32 64, 64
      %23 = vsyncadd [#allocation4], %s22
      %s25 = sshll.u32 [#allocation3], 4
      %s26 = int_to_ptr.vmem [resolvable:$true] %s25
      %28 = dma.hbm_to_vmem [thread:$0]  %s1, 64, %s26, [#allocation4]
    $region9: #{tpu_custom_call.1} parent=1 // pred_fallthru
      _
    // Predicated region
    $region10: #{tpu_custom_call.1} parent=1 // pred_check
      _
    $region11: #{tpu_custom_call.1} parent=1 // pred_check_branch
      %30 = sbr.rel (0) target = $region13
    $region12: #{tpu_custom_call.1} parent=1 // pred_region
      _
    $region13: #{tpu_custom_call.1} parent=1 // pred_fallthru
      _
    // Predicated region
    $region14: #{tpu_custom_call.1} parent=1 // pred_check
      _
    $region15: #{tpu_custom_call.1} parent=1 // pred_check_branch
      %32 = sbr.rel (0) target = $region17
    $region16: #{tpu_custom_call.1} parent=1 // pred_region
      _
    $region17: #{tpu_custom_call.1} parent=1 // pred_fallthru
      _
    // Predicated region
    $region18: #{tpu_custom_call.1} parent=1 // pred_check
      _
    $region19: #{tpu_custom_call.1} parent=1 // pred_check_branch
      %34 = sbr.rel (0) target = $region21
    $region20: #{tpu_custom_call.1} parent=1 // pred_region
      _
    $region21: #{tpu_custom_call.1} parent=1 // pred_fallthru
      _
    // Predicated region
    $region22: #{tpu_custom_call.1} parent=1 // pred_check
      _
    $region23: #{tpu_custom_call.1} parent=1 // pred_check_branch
      %36 = sbr.rel (0) target = $region25
    $region24: #{tpu_custom_call.1} parent=1 // pred_region
      _
    $region25: #{tpu_custom_call.1} parent=1 // pred_fallthru
      _
    // Predicated region
    $region26: #{tpu_custom_call.1} parent=1 // pred_check
      _
    $region27: #{tpu_custom_call.1} parent=1 // pred_check_branch
      %38 = sbr.rel (0) target = $region29
    $region28: #{tpu_custom_call.1} parent=1 // pred_region
      _
    $region29: #{tpu_custom_call.1} parent=1 // pred_fallthru
      _
    // Predicated region
    $region30: #{tpu_custom_call.1} parent=1 // pred_check
      _
    $region31: #{tpu_custom_call.1} parent=1 // pred_check_branch
      %40 = sbr.rel (0) target = $region33
    $region32: #{tpu_custom_call.1} parent=1 // pred_region
      _
    $region33: #{tpu_custom_call.1} parent=1 // pred_fallthru
      _
    // Predicated region
    $region34: #{tpu_custom_call.1} parent=1 // pred_check
      _
    $region35: #{tpu_custom_call.1} parent=1 // pred_check_branch
      %42 = sbr.rel (0) target = $region37
    $region36: #{tpu_custom_call.1} parent=1 // pred_region
      _
    $region37: #{tpu_custom_call.1} parent=1 // pred_fallthru
      _
    // Predicated region
    $region38: #{tpu_custom_call.1} parent=1 // pred_check
      _
    $region39: #{tpu_custom_call.1} parent=1 // pred_check_branch
      %44 = sbr.rel (0) target = $region41
    $region40: #{tpu_custom_call.1} parent=1 // pred_region
      %45 = dma.done [#allocation4], 64
    $region41: #{tpu_custom_call.1} parent=1 // pred_fallthru
      _
    %v47 = vld [vmem:[%s0] sm:$0xf]
    %v48 = vld [vmem:[%s0 + $0x4] sm:$0xf]
    %v49 = vld [vmem:[#allocation3] sm:$0xf]
    %v50 = vld [vmem:[%s2] sm:$0x1]
    %v52 = vlaneseq
    %v53 = vshrl.u32 %v52, 7
    %v54 = vsub.s32 0, %v53
    %v55 = vrot.slane %v50, %v54
    %v59 = vunpack.c.l.b16 %v47
    %v60 = vunpack.c.l.b16 %v48
    %v61 = vpack.c.b16 %v60, %v59
    %vm62 = vcmask 64512
    %v64 = vsel %vm62, %v61, 0
    %vm66 = vcmask 1043456
    %v68 = vsel %vm66, %v49, 0
    %70 = vmatprep.subr.bf16.mxu0 0
    %71 = vmatpush1.bf16.msra.mxu0 0
    %72 = vmatprep.subr.bf16.mxu0 0
    %73 = vmatpush1.bf16.msra.mxu0 0
    %74 = vmatprep.subr.bf16.mxu0 0
    %75 = vmatpush1.bf16.msra.mxu0 0
    %76 = vmatprep.subr.bf16.mxu0 0
    %77 = vmatpush1.bf16.msra.mxu0 0
    %78 = vmatprep.subr.bf16.mxu0 0
    %79 = vmatpush1.bf16.msra.mxu0 0
    %80 = vmatprep.subr.bf16.mxu0 0
    %81 = vmatpush1.bf16.msra.mxu0 0
    %82 = vmatprep.subr.bf16.mxu0 0
    %83 = vmatpush1.bf16.msra.mxu0 0
    %84 = vmatprep.subr.bf16.mxu0 0
    %85 = vmatpush1.bf16.msra.mxu0 %v68
    %86 = vmatprep.subr.bf16.mxu0 0
    %87 = vmatpush2.bf16.msra.mxu0 0
    %88 = vmatprep.subr.bf16.mxu0 0
    %89 = vmatpush2.bf16.msra.mxu0 0
    %90 = vmatprep.subr.bf16.mxu0 0
    %91 = vmatpush2.bf16.msra.mxu0 0
    %92 = vmatprep.subr.bf16.mxu0 0
    %93 = vmatpush2.bf16.msra.mxu0 0
    %94 = vmatprep.subr.bf16.mxu0 0
    %95 = vmatpush2.bf16.msra.mxu0 0
    %96 = vmatprep.subr.bf16.mxu0 0
    %97 = vmatpush2.bf16.msra.mxu0 0
    %98 = vmatprep.subr.bf16.mxu0 0
    %99 = vmatpush2.bf16.msra.mxu0 0
    %100 = vmatprep.subr.bf16.mxu0 0
    %101 = vmatpush2.bf16.msra.mxu0 0
    %102 = vmatprep.mubr.bf16.mxu0 0
    %103 = vmatmul.mubr.bf16.gmra.mxu0 %v64
    %v104 = vpop.f32.mrf.mxu0
    %v105 = vadd.f32 %v55, %v104
    %v106 = vpop.f32.mrf.mxu0
    %v107 = vpop.f32.mrf.mxu0
    %v108 = vadd.f32 %v55, %v107
    %v109 = vpop.f32.mrf.mxu0
    %110 = vdwg.mxu0
    %vm111 = vcmp.gt.f32.partialorder %v105, 0.0
    %vm112 = vcmp.gt.f32.partialorder %v108, 0.0
    %v113 = vmul.f32 %v105, 0.01
    %v114 = vmul.f32 %v108, 0.01
    %v115 = vsel %vm111, %v105, %v113
    %v116 = vsel %vm112, %v108, %v114
    %v117 = vpack.c.bf16 %v116, %v115
    %v118 = vld [vmem:[%s3] sm:$0xf]
    %v119 = vld [vmem:[%s3 + $0x4] sm:$0xf]
    %v120 = vld [vmem:[%s3 + $0x8] sm:$0xf]
    %v121 = vld [vmem:[%s3 + $0xc] sm:$0xf]
    %v122 = vld [vmem:[%s4] sm:$0x1]
    %v124 = vlaneseq
    %v125 = vshrl.u32 %v124, 7
    %v126 = vsub.s32 0, %v125
    %v127 = vrot.slane %v122, %v126
    %v133 = vunpack.c.l.b16 %v118
    %v134 = vunpack.c.l.b16 %v119
    %v135 = vunpack.c.l.b16 %v120
    %v136 = vunpack.c.l.b16 %v121
    %v137 = vpack.c.b16 %v134, %v133
    %v138 = vpack.c.b16 %v136, %v135
    %vm141 = vcmask 261120
    %v143 = vsel %vm141, %v117, 0
    %145 = vmatprep.subr.bf16.mxu0 0
    %146 = vmatpush1.bf16.msra.mxu0 0
    %147 = vmatprep.subr.bf16.mxu0 0
    %148 = vmatpush1.bf16.msra.mxu0 0
    %149 = vmatprep.subr.bf16.mxu0 0
    %150 = vmatpush1.bf16.msra.mxu0 0
    %151 = vmatprep.subr.bf16.mxu0 0
    %152 = vmatpush1.bf16.msra.mxu0 0
    %153 = vmatprep.subr.bf16.mxu0 0
    %154 = vmatpush1.bf16.msra.mxu0 0
    %155 = vmatprep.subr.bf16.mxu0 0
    %156 = vmatpush1.bf16.msra.mxu0 0
    %157 = vmatprep.subr.bf16.mxu0 0
    %158 = vmatpush1.bf16.msra.mxu0 %v138
    %159 = vmatprep.subr.bf16.mxu0 0
    %160 = vmatpush1.bf16.msra.mxu0 %v137
    %161 = vmatprep.subr.bf16.mxu0 0
    %162 = vmatpush2.bf16.msra.mxu0 0
    %163 = vmatprep.subr.bf16.mxu0 0
    %164 = vmatpush2.bf16.msra.mxu0 0
    %165 = vmatprep.subr.bf16.mxu0 0
    %166 = vmatpush2.bf16.msra.mxu0 0
    %167 = vmatprep.subr.bf16.mxu0 0
    %168 = vmatpush2.bf16.msra.mxu0 0
    %169 = vmatprep.subr.bf16.mxu0 0
    %170 = vmatpush2.bf16.msra.mxu0 0
    %171 = vmatprep.subr.bf16.mxu0 0
    %172 = vmatpush2.bf16.msra.mxu0 0
    %173 = vmatprep.subr.bf16.mxu0 0
    %174 = vmatpush2.bf16.msra.mxu0 0
    %175 = vmatprep.subr.bf16.mxu0 0
    %176 = vmatpush2.bf16.msra.mxu0 0
    %177 = vmatprep.mubr.bf16.mxu0 0
    %178 = vmatmul.mubr.bf16.gmra.mxu0 %v143
    %v179 = vpop.f32.mrf.mxu0
    %v180 = vadd.f32 %v127, %v179
    %v181 = vpop.f32.mrf.mxu0
    %v182 = vpop.f32.mrf.mxu0
    %v183 = vadd.f32 %v127, %v182
    %v184 = vpop.f32.mrf.mxu0
    %185 = vdwg.mxu0
    %vm186 = vcmp.gt.f32.partialorder %v180, 0.0
    %vm187 = vcmp.gt.f32.partialorder %v183, 0.0
    %v188 = vmul.f32 %v180, 0.01
    %v189 = vmul.f32 %v183, 0.01
    %v190 = vsel %vm186, %v180, %v188
    %v191 = vsel %vm187, %v183, %v189
    %v192 = vpack.c.bf16 %v191, %v190
    %v193 = vld [vmem:[%s5] sm:$0xf]
    %v194 = vld [vmem:[%s5 + $0x4] sm:$0xf]
    %v195 = vld [vmem:[%s5 + $0x8] sm:$0xf]
    %v196 = vld [vmem:[%s5 + $0xc] sm:$0xf]
    %v197 = vld [vmem:[%s6] sm:$0x1]
    %v199 = vlaneseq
    %v200 = vshrl.u32 %v199, 7
    %v201 = vsub.s32 0, %v200
    %v202 = vrot.slane %v197, %v201
    %v208 = vunpack.c.l.b16 %v193
    %v209 = vunpack.c.l.b16 %v194
    %v210 = vunpack.c.l.b16 %v195
    %v211 = vunpack.c.l.b16 %v196
    %v212 = vpack.c.b16 %v209, %v208
    %v213 = vpack.c.b16 %v211, %v210
    %v217 = vsel %vm141, %v192, 0
    %219 = vmatprep.subr.bf16.mxu0 0
    %220 = vmatpush1.bf16.msra.mxu0 0
    %221 = vmatprep.subr.bf16.mxu0 0
    %222 = vmatpush1.bf16.msra.mxu0 0
    %223 = vmatprep.subr.bf16.mxu0 0
    %224 = vmatpush1.bf16.msra.mxu0 0
    %225 = vmatprep.subr.bf16.mxu0 0
    %226 = vmatpush1.bf16.msra.mxu0 0
    %227 = vmatprep.subr.bf16.mxu0 0
    %228 = vmatpush1.bf16.msra.mxu0 0
    %229 = vmatprep.subr.bf16.mxu0 0
    %230 = vmatpush1.bf16.msra.mxu0 0
    %231 = vmatprep.subr.bf16.mxu0 0
    %232 = vmatpush1.bf16.msra.mxu0 %v213
    %233 = vmatprep.subr.bf16.mxu0 0
    %234 = vmatpush1.bf16.msra.mxu0 %v212
    %235 = vmatprep.subr.bf16.mxu0 0
    %236 = vmatpush2.bf16.msra.mxu0 0
    %237 = vmatprep.subr.bf16.mxu0 0
    %238 = vmatpush2.bf16.msra.mxu0 0
    %239 = vmatprep.subr.bf16.mxu0 0
    %240 = vmatpush2.bf16.msra.mxu0 0
    %241 = vmatprep.subr.bf16.mxu0 0
    %242 = vmatpush2.bf16.msra.mxu0 0
    %243 = vmatprep.subr.bf16.mxu0 0
    %244 = vmatpush2.bf16.msra.mxu0 0
    %245 = vmatprep.subr.bf16.mxu0 0
    %246 = vmatpush2.bf16.msra.mxu0 0
    %247 = vmatprep.subr.bf16.mxu0 0
    %248 = vmatpush2.bf16.msra.mxu0 0
    %249 = vmatprep.subr.bf16.mxu0 0
    %250 = vmatpush2.bf16.msra.mxu0 0
    %251 = vmatprep.mubr.bf16.mxu0 0
    %252 = vmatmul.mubr.bf16.gmra.mxu0 %v217
    %v253 = vpop.f32.mrf.mxu0
    %v254 = vadd.f32 %v202, %v253
    %v255 = vpop.f32.mrf.mxu0
    %v256 = vpop.f32.mrf.mxu0
    %v257 = vadd.f32 %v202, %v256
    %v258 = vpop.f32.mrf.mxu0
    %259 = vdwg.mxu0
    %vm260 = vcmp.gt.f32.partialorder %v254, 0.0
    %vm261 = vcmp.gt.f32.partialorder %v257, 0.0
    %v262 = vmul.f32 %v254, 0.01
    %v263 = vmul.f32 %v257, 0.01
    %v264 = vsel %vm260, %v254, %v262
    %v265 = vsel %vm261, %v257, %v263
    %v266 = vpack.c.bf16 %v265, %v264
    %v267 = vld [vmem:[%s7] sm:$0xf]
    %v268 = vld [vmem:[%s7 + $0x4] sm:$0xf]
    %v269 = vld [vmem:[%s7 + $0x8] sm:$0xf]
    %v270 = vld [vmem:[%s7 + $0xc] sm:$0xf]
    %v271 = vld [vmem:[#allocation2] sm:$0x1]
    %v273 = vlaneseq
    %v274 = vshrl.u32 %v273, 7
    %v275 = vsub.s32 0, %v274
    %v276 = vrot.slane %v271, %v275
    %v282 = vunpack.c.l.b16 %v267
    %v283 = vunpack.c.l.b16 %v268
    %v284 = vunpack.c.l.b16 %v269
    %v285 = vunpack.c.l.b16 %v270
    %v286 = vpack.c.b16 %v283, %v282
    %v287 = vpack.c.b16 %v285, %v284
    %v291 = vsel %vm141, %v266, 0
    %293 = vmatprep.subr.bf16.mxu0 0
    %294 = vmatpush1.bf16.msra.mxu0 0
    %295 = vmatprep.subr.bf16.mxu0 0
    %296 = vmatpush1.bf16.msra.mxu0 0
    %297 = vmatprep.subr.bf16.mxu0 0
    %298 = vmatpush1.bf16.msra.mxu0 0
    %299 = vmatprep.subr.bf16.mxu0 0
    %300 = vmatpush1.bf16.msra.mxu0 0
    %301 = vmatprep.subr.bf16.mxu0 0
    %302 = vmatpush1.bf16.msra.mxu0 0
    %303 = vmatprep.subr.bf16.mxu0 0
    %304 = vmatpush1.bf16.msra.mxu0 0
    %305 = vmatprep.subr.bf16.mxu0 0
    %306 = vmatpush1.bf16.msra.mxu0 %v287
    %307 = vmatprep.subr.bf16.mxu0 0
    %308 = vmatpush1.bf16.msra.mxu0 %v286
    %309 = vmatprep.subr.bf16.mxu0 0
    %310 = vmatpush2.bf16.msra.mxu0 0
    %311 = vmatprep.subr.bf16.mxu0 0
    %312 = vmatpush2.bf16.msra.mxu0 0
    %313 = vmatprep.subr.bf16.mxu0 0
    %314 = vmatpush2.bf16.msra.mxu0 0
    %315 = vmatprep.subr.bf16.mxu0 0
    %316 = vmatpush2.bf16.msra.mxu0 0
    %317 = vmatprep.subr.bf16.mxu0 0
    %318 = vmatpush2.bf16.msra.mxu0 0
    %319 = vmatprep.subr.bf16.mxu0 0
    %320 = vmatpush2.bf16.msra.mxu0 0
    %321 = vmatprep.subr.bf16.mxu0 0
    %322 = vmatpush2.bf16.msra.mxu0 0
    %323 = vmatprep.subr.bf16.mxu0 0
    %324 = vmatpush2.bf16.msra.mxu0 0
    %325 = vmatprep.mubr.bf16.mxu0 0
    %326 = vmatmul.mubr.bf16.gmra.mxu0 %v291
    %v327 = vpop.f32.mrf.mxu0
    %v328 = vadd.f32 %v276, %v327
    %v329 = vpop.f32.mrf.mxu0
    %v330 = vpop.f32.mrf.mxu0
    %v331 = vadd.f32 %v276, %v330
    %v332 = vpop.f32.mrf.mxu0
    %333 = vdwg.mxu0
    %vm334 = vcmask 7168
    %335 = vst.msk [vmem:[%s9] sm:$0xff] %vm334, %v328
    %336 = vst.msk [vmem:[%s9 + $0x8] sm:$0xff] %vm334, %v331
    // Predicated region
    $region42: #{tpu_custom_call.1} parent=1 // pred_check
      _
    $region43: #{tpu_custom_call.1} parent=1 // pred_check_branch
      %338 = sbr.rel (0) target = $region45
    $region44: #{tpu_custom_call.1} parent=1 // pred_region
      _
    $region45: #{tpu_custom_call.1} parent=1 // pred_fallthru
      _
    // Predicated region
    $region46: #{tpu_custom_call.1} parent=1 // pred_check
      _
    $region47: #{tpu_custom_call.1} parent=1 // pred_check_branch
      %340 = sbr.rel (0) target = $region49
    $region48: #{tpu_custom_call.1} parent=1 // pred_region
      _
    $region49: #{tpu_custom_call.1} parent=1 // pred_fallthru
      _
    %341 = vsyncpa [#allocation4], 1

</llo_original>
